<compile_context>
chip_gen: v6e
topology: v6e:2x2x1
jax: 0.10.0
libtpu: 0.0.40
codegen_flags: <defaults>
</compile_context>

<pallas_src>
import math

import jax
import jax.numpy as jnp
from jax.experimental import pallas as pl
from jax.experimental.pallas import tpu as pltpu


def _gelu_exact(x):
    # nn.GELU() default is the exact erf-based formulation.
    return 0.5 * x * (1.0 + jax.lax.erf(x * (1.0 / math.sqrt(2.0))))


def _mlp_kernel_single(x_ref, w1_ref, b1_ref, w2_ref, b2_ref, o_ref):
    # Hidden dim not tiled: fully fused, no scratch round-trip.
    # x_ref:  (1, Cin, TM)   w1_ref: (Hid, Cin)   b1_ref: (Hid, 1)
    # w2_ref: (Cout, Hid)    b2_ref: (Cout, 1)    o_ref:  (1, Cout, TM)
    x = x_ref[0]                                                     # (Cin, TM)
    h = jnp.dot(w1_ref[...], x,
                preferred_element_type=jnp.float32) + b1_ref[...]   # (Hid, TM)
    h = _gelu_exact(h).astype(w2_ref.dtype)
    y = jnp.dot(w2_ref[...], h,
                preferred_element_type=jnp.float32) + b2_ref[...]   # (Cout, TM)
    o_ref[0] = y.astype(o_ref.dtype)


def _mlp_kernel_tiled(x_ref, w1_ref, b1_ref, w2_ref, b2_ref, o_ref, acc_ref):
    # Hidden dim tiled over grid axis 2 (reduction).
    # x_ref:  (1, Cin, TM)   w1_ref: (TK, Cin)    b1_ref: (TK, 1)
    # w2_ref: (Cout, TK)     b2_ref: (Cout, 1)    o_ref:  (1, Cout, TM)
    # acc_ref:(Cout, TM) f32 accumulator
    k = pl.program_id(2)

    @pl.when(k == 0)
    def _init():
        acc_ref[...] = jnp.zeros_like(acc_ref)

    x = x_ref[0]                                                     # (Cin, TM)
    h = jnp.dot(w1_ref[...], x,
                preferred_element_type=jnp.float32) + b1_ref[...]   # (TK, TM)
    h = _gelu_exact(h).astype(w2_ref.dtype)
    acc_ref[...] += jnp.dot(w2_ref[...], h,
                            preferred_element_type=jnp.float32)     # (Cout, TM)

    @pl.when(k == pl.num_programs(2) - 1)
    def _finalize():
        o_ref[0] = (acc_ref[...] + b2_ref[...]).astype(o_ref.dtype)


def _choose_tile(full, target):
    """Largest multiple-of-128 divisor of `full` that is <= target, or `full`
    itself (full-extent blocks are always legal) when no tiling is possible."""
    if full <= target or full % 128 != 0:
        return full
    t = (target // 128) * 128
    while full % t != 0:
        t -= 128
    return t


def mlp_forward(x_nchw, w1, b1, w2, b2, *, tm_target=512, tk_target=512):
    """x_nchw: [B, Cin, H, W]; w1: [Hid, Cin]; b1: [Hid]; w2: [Cout, Hid]; b2: [Cout]."""
    B, Cin, H, W = x_nchw.shape
    Hid = w1.shape[0]
    Cout = w2.shape[0]
    HW = H * W

    # NCHW -> [B, Cin, H*W]; contiguous reshape, no transpose / extra HBM pass.
    x3 = x_nchw.reshape(B, Cin, HW)

    tm = _choose_tile(HW, tm_target)    # token tile (lane axis), divides HW
    tk = _choose_tile(Hid, tk_target)   # hidden tile, divides Hid

    b1_2d = b1.reshape(Hid, 1)
    b2_2d = b2.reshape(Cout, 1)

    dsz = jnp.dtype(x_nchw.dtype).itemsize
    wsz = jnp.dtype(w1.dtype).itemsize
    num_k = Hid // tk

    # VMEM estimate (double-buffered inputs/outputs + f32 accumulator), with
    # headroom; keeps us within the 64 MiB physical VMEM of v7x.
    vmem_est = 2 * (Cin * tm * dsz + tk * Cin * wsz + Cout * tk * wsz
                    + Cout * tm * dsz + (tk + Cout) * wsz)
    vmem_est += Cout * tm * 4
    vmem_limit = int(min(64 * 1024 * 1024, max(32 * 1024 * 1024, 2 * vmem_est)))

    if num_k == 1:
        # Fully fused single pass: no reduction axis, no scratch accumulator.
        grid = (B, HW // tm)
        out = pl.pallas_call(
            _mlp_kernel_single,
            out_shape=jax.ShapeDtypeStruct((B, Cout, HW), x_nchw.dtype),
            grid_spec=pltpu.PrefetchScalarGridSpec(
                num_scalar_prefetch=0,
                grid=grid,
                in_specs=[
                    pl.BlockSpec((1, Cin, tm), lambda b, i: (b, 0, i)),   # x
                    pl.BlockSpec((Hid, Cin), lambda b, i: (0, 0)),        # W1
                    pl.BlockSpec((Hid, 1), lambda b, i: (0, 0)),          # b1
                    pl.BlockSpec((Cout, Hid), lambda b, i: (0, 0)),       # W2
                    pl.BlockSpec((Cout, 1), lambda b, i: (0, 0)),         # b2
                ],
                out_specs=pl.BlockSpec((1, Cout, tm), lambda b, i: (b, 0, i)),
            ),
            compiler_params=pltpu.CompilerParams(
                dimension_semantics=("parallel", "parallel"),
                vmem_limit_bytes=vmem_limit,
            ),
        )(x3, w1, b1_2d, w2, b2_2d)
    else:
        grid = (B, HW // tm, num_k)
        out = pl.pallas_call(
            _mlp_kernel_tiled,
            out_shape=jax.ShapeDtypeStruct((B, Cout, HW), x_nchw.dtype),
            grid_spec=pltpu.PrefetchScalarGridSpec(
                num_scalar_prefetch=0,
                grid=grid,
                in_specs=[
                    pl.BlockSpec((1, Cin, tm), lambda b, i, k: (b, 0, i)),  # x
                    pl.BlockSpec((tk, Cin), lambda b, i, k: (k, 0)),        # W1 slice
                    pl.BlockSpec((tk, 1), lambda b, i, k: (k, 0)),          # b1 slice
                    pl.BlockSpec((Cout, tk), lambda b, i, k: (0, k)),       # W2 slice
                    pl.BlockSpec((Cout, 1), lambda b, i, k: (0, 0)),        # b2
                ],
                out_specs=pl.BlockSpec((1, Cout, tm), lambda b, i, k: (b, 0, i)),
                scratch_shapes=[pltpu.VMEM((Cout, tm), jnp.float32)],
            ),
            compiler_params=pltpu.CompilerParams(
                dimension_semantics=("parallel", "parallel", "arbitrary"),
                vmem_limit_bytes=vmem_limit,
            ),
        )(x3, w1, b1_2d, w2, b2_2d)

    return out.reshape(B, Cout, H, W)


def init_mlp_params(key, in_features, hidden_features, out_features, gain=1.0,
                    dtype=jnp.float32):
    """Deterministic init mirroring the PyTorch module's __init__.
    Weights are kept in the native PyTorch 1x1-conv layout:
      w1: [hidden, in], w2: [out, hidden]."""
    k1, k2 = jax.random.split(key)
    scale1 = math.sqrt(2.0 / in_features)
    scale2 = math.sqrt(gain / hidden_features)
    w1 = scale1 * jax.random.normal(k1, (hidden_features, in_features), dtype)
    b1 = jnp.zeros((hidden_features,), dtype)
    w2 = scale2 * jax.random.normal(k2, (out_features, hidden_features), dtype)
    b2 = jnp.zeros((out_features,), dtype)
    return w1, b1, w2, b2


if __name__ == "__main__":
    key = jax.random.PRNGKey(0)
    kx, kp = jax.random.split(key)

    B, Cin, Hsp, Wsp = 2, 4, 16, 16
    hidden = 32
    Cout = Cin  # out_features defaults to in_features

    x = jax.random.normal(kx, (B, Cin, Hsp, Wsp), jnp.float32)
    w1, b1, w2, b2 = init_mlp_params(kp, Cin, hidden, Cout, gain=1.0)

    y = mlp_forward(x, w1, b1, w2, b2)
    y = jax.block_until_ready(y)

    # Pure-JAX reference (1x1 conv == per-pixel channel matmul).
    x3 = x.reshape(B, Cin, Hsp * Wsp)
    h_ref = _gelu_exact(jnp.einsum("hc,bcn->bhn", w1, x3) + b1[None, :, None])
    y_ref = (jnp.einsum("oh,bhn->bon", w2, h_ref)
             + b2[None, :, None]).reshape(B, Cout, Hsp, Wsp)

    assert y.shape == (B, Cout, Hsp, Wsp)
    assert jnp.allclose(y, y_ref, atol=1e-5, rtol=1e-5), \
        float(jnp.max(jnp.abs(y - y_ref)))

    print("KERNEL_OK")
</pallas_src>

<mosaic_0001>
module attributes {stable_mosaic.version = 11 : i64} {
  func.func @_mlp_kernel_single(%arg0: i32, %arg1: i32, %arg2: memref<1x4x256xf32, #tpu.memory_space<vmem>>, %arg3: memref<32x4xf32, #tpu.memory_space<vmem>>, %arg4: memref<32x1xf32, #tpu.memory_space<vmem>>, %arg5: memref<4x32xf32, #tpu.memory_space<vmem>>, %arg6: memref<4x1xf32, #tpu.memory_space<vmem>>, %arg7: memref<1x4x256xf32, #tpu.memory_space<vmem>>) attributes {dimension_semantics = [#tpu.dimension_semantics<parallel>, #tpu.dimension_semantics<parallel>], iteration_bounds = array<i64: 2, 1>, scalar_prefetch = 0 : i64, scratch_operands = 0 : i64, tpu.core_type = #tpu.core_type<tc>, window_params = [{transform_indices = @transform_0, window_bounds = array<i64: 1, 4, 256>}, {pipeline_mode = #tpu.pipeline_mode<synchronous>, transform_indices = @transform_1, window_bounds = array<i64: 32, 4>}, {pipeline_mode = #tpu.pipeline_mode<synchronous>, transform_indices = @transform_2, window_bounds = array<i64: 32, 1>}, {pipeline_mode = #tpu.pipeline_mode<synchronous>, transform_indices = @transform_3, window_bounds = array<i64: 4, 32>}, {pipeline_mode = #tpu.pipeline_mode<synchronous>, transform_indices = @transform_4, window_bounds = array<i64: 4, 1>}, {transform_indices = @transform_5, window_bounds = array<i64: 1, 4, 256>}]} {
    %c0 = arith.constant 0 : index
    %c0_0 = arith.constant 0 : index
    %c0_1 = arith.constant 0 : index
    %0 = vector.load %arg2[%c0, %c0_0, %c0_1] : memref<1x4x256xf32, #tpu.memory_space<vmem>>, vector<1x4x256xf32>
    %1 = vector.shape_cast %0 : vector<1x4x256xf32> to vector<4x256xf32>
    %c0_2 = arith.constant 0 : index
    %c0_3 = arith.constant 0 : index
    %2 = vector.load %arg3[%c0_2, %c0_3] : memref<32x4xf32, #tpu.memory_space<vmem>>, vector<32x4xf32>
    %cst = arith.constant dense<0.000000e+00> : vector<32x256xf32>
    %3 = tpu.matmul %2, %1, %cst {dimension_numbers = #tpu.dot_dimension_numbers<[1], [0], [0], [1], [0, 0, 1, 1], [], []>} : vector<32x4xf32>, vector<4x256xf32>, vector<32x256xf32> -> vector<32x256xf32>
    %c0_4 = arith.constant 0 : index
    %c0_5 = arith.constant 0 : index
    %4 = vector.load %arg4[%c0_4, %c0_5] : memref<32x1xf32, #tpu.memory_space<vmem>>, vector<32x1xf32>
    %5 = vector.broadcast %4 : vector<32x1xf32> to vector<32x256xf32>
    %6 = arith.addf %3, %5 : vector<32x256xf32>
    %cst_6 = arith.constant 5.000000e-01 : f32
    %7 = vector.broadcast %cst_6 : f32 to vector<32x256xf32>
    %8 = arith.mulf %7, %6 : vector<32x256xf32>
    %cst_7 = arith.constant 0.707106769 : f32
    %9 = vector.broadcast %cst_7 : f32 to vector<32x256xf32>
    %10 = arith.mulf %6, %9 : vector<32x256xf32>
    %11 = math.erf %10 : vector<32x256xf32>
    %cst_8 = arith.constant 1.000000e+00 : f32
    %12 = vector.broadcast %cst_8 : f32 to vector<32x256xf32>
    %13 = arith.addf %12, %11 : vector<32x256xf32>
    %14 = arith.mulf %8, %13 : vector<32x256xf32>
    %c0_9 = arith.constant 0 : index
    %c0_10 = arith.constant 0 : index
    %15 = vector.load %arg5[%c0_9, %c0_10] : memref<4x32xf32, #tpu.memory_space<vmem>>, vector<4x32xf32>
    %cst_11 = arith.constant dense<0.000000e+00> : vector<4x256xf32>
    %16 = tpu.matmul %15, %14, %cst_11 {dimension_numbers = #tpu.dot_dimension_numbers<[1], [0], [0], [1], [0, 0, 1, 1], [], []>} : vector<4x32xf32>, vector<32x256xf32>, vector<4x256xf32> -> vector<4x256xf32>
    %c0_12 = arith.constant 0 : index
    %c0_13 = arith.constant 0 : index
    %17 = vector.load %arg6[%c0_12, %c0_13] : memref<4x1xf32, #tpu.memory_space<vmem>>, vector<4x1xf32>
    %18 = vector.broadcast %17 : vector<4x1xf32> to vector<4x256xf32>
    %19 = arith.addf %16, %18 : vector<4x256xf32>
    %c0_14 = arith.constant 0 : index
    %c0_15 = arith.constant 0 : index
    %c0_16 = arith.constant 0 : index
    %20 = vector.load %arg7[%c0_14, %c0_15, %c0_16] : memref<1x4x256xf32, #tpu.memory_space<vmem>>, vector<1x4x256xf32>
    %21 = vector.shape_cast %20 : vector<1x4x256xf32> to vector<4x256xf32>
    %22 = vector.shape_cast %19 : vector<4x256xf32> to vector<1x4x256xf32>
    tpu.vector_store %arg7[%c0_14, %c0_15, %c0_16], %22 {strides = array<i32>} : memref<1x4x256xf32, #tpu.memory_space<vmem>>, vector<1x4x256xf32>,
    return
  }
  func.func @transform_0(%arg0: i32, %arg1: i32) -> (i32, i32, i32) {
    %c0_i32 = arith.constant 0 : i32
    %c0_i32_0 = arith.constant 0 : i32
    return %arg0, %c0_i32, %arg1 : i32, i32, i32
  }
  func.func @transform_1(%arg0: i32, %arg1: i32) -> (i32, i32) {
    %c0_i32 = arith.constant 0 : i32
    %c0_i32_0 = arith.constant 0 : i32
    %c0_i32_1 = arith.constant 0 : i32
    return %c0_i32, %c0_i32_0 : i32, i32
  }
  func.func @transform_2(%arg0: i32, %arg1: i32) -> (i32, i32) {
    %c0_i32 = arith.constant 0 : i32
    %c0_i32_0 = arith.constant 0 : i32
    %c0_i32_1 = arith.constant 0 : i32
    return %c0_i32, %c0_i32_0 : i32, i32
  }
  func.func @transform_3(%arg0: i32, %arg1: i32) -> (i32, i32) {
    %c0_i32 = arith.constant 0 : i32
    %c0_i32_0 = arith.constant 0 : i32
    %c0_i32_1 = arith.constant 0 : i32
    return %c0_i32, %c0_i32_0 : i32, i32
  }
  func.func @transform_4(%arg0: i32, %arg1: i32) -> (i32, i32) {
    %c0_i32 = arith.constant 0 : i32
    %c0_i32_0 = arith.constant 0 : i32
    %c0_i32_1 = arith.constant 0 : i32
    return %c0_i32, %c0_i32_0 : i32, i32
  }
  func.func @transform_5(%arg0: i32, %arg1: i32) -> (i32, i32, i32) {
    %c0_i32 = arith.constant 0 : i32
    %c0_i32_0 = arith.constant 0 : i32
    return %arg0, %c0_i32, %arg1 : i32, i32, i32
  }
}

</mosaic_0001>

<llo_original>
// kernel: tpu_custom_call.1
$region0: #{tpu_custom_call.1}
  #allocation0 [shape = 'u32[]', space=smem, size = 0x4, offset = 0x4, fixed_abs, tag = 'smem constant byte address 0x4 - core index']
  #allocation1 [shape = 'u32[144,128]{1,0:T(1,128)}', space=vmem, size = 0x12000, scoped, tag = 'internal scratch']
  %s0 = inlined_call_operand.vmem [shape: f32[2,4,256], index: 0, kind: input, shape index: {}]
  %s1 = inlined_call_operand.vmem [shape: f32[32,4], index: 1, kind: input, shape index: {}]
  %s2 = inlined_call_operand.vmem [shape: f32[32,1], index: 2, kind: input, shape index: {}]
  %s3 = inlined_call_operand.vmem [shape: f32[4,32], index: 3, kind: input, shape index: {}]
  %s4 = inlined_call_operand.vmem [shape: f32[4,1], index: 4, kind: input, shape index: {}]
  %s5 = inlined_call_operand.hbm [shape: f32[2,4,256], index: 5, kind: output, shape index: {}]
  %s6 = sld [smem:[#allocation0]]
  $region53: #{tpu_custom_call.1} parent=0
    _
  %s8 = ssub.s32 1, %s6
  %s9 = scalar_select 0, %s8, %s6
  $region1: #{tpu_custom_call.1} parent=0
    #allocation2 [shape = 'u8[8192]{0}', space=vmem, size = 0x2000, scoped, tag = 'output window, operand 0']
    #allocation3 [shape = 's32[2]{0}', space=sflag, size = 0x8, scoped, tag = 'scoped memory for tpu_custom_call.1']
    %10 = vsyncpa [#allocation3], 0
    %s11 = scalar_lea.sflag [#allocation3], 1
    %12 = vsyncpa %s11, 0
    loop: start=0, step=1, limit=4
    $region2: #{tpu_custom_call.1} parent=1 // loop_pre_header
      _
    $region3: #{tpu_custom_call.1} parent=1 // loop_header
      %s14 = sphi 0, %s18
      %p15 = scmp.ge.s32.totalorder %s14, 4
      %s21 = sphi 0, %s33
      %s22 = sphi 0, %s29
      %s23 = sphi 0, %s21
      %s24 = sphi 0, %s22
      %s25 = sphi 0, %s23
      %s26 = sphi 0, %s24
      %s38 = sphi 0, %s40
      %s41 = sphi 0, %s38
      %s42 = sphi 0, %s41
      %s58 = sphi 0, %s42
      %s62 = sphi 0, %s62
      %s64 = sphi 0, %s62
      %s65 = sphi 0, %s64
      %s79 = sphi 0, %s65
      %s83 = sphi 0, %s83
      %s85 = sphi 0, %s83
      %s86 = sphi 0, %s85
      %s100 = sphi 0, %s86
      %s104 = sphi 0, %s104
      %s106 = sphi 0, %s104
      %s107 = sphi 0, %s106
      %s121 = sphi 0, %s107
      %s125 = sphi 0, %s125
      %s127 = sphi 0, %s125
      %s128 = sphi 0, %s127
      %s142 = sphi 0, %s128
      %s150 = sphi 0, %s152
      %s153 = sphi 0, %s150
      %s154 = sphi 0, %s153
      %s170 = sphi 0, %s154
    $region4: #{tpu_custom_call.1} parent=1 // loop_header_branch
      %17 = sbr.rel (%p15) target = $region8
    $region5: #{tpu_custom_call.1} parent=1 // loop_body
      %s19 = ssub.s32 %s14, 1
      %s20 = ssub.s32 %s14, 2
      %s27 = sadd.s32 1, %s22
      %p28 = scmp.ge.s32.totalorder %s27, 1
      %s29 = scalar_select %p28, 0, %s27
      %s30 = sadd.s32 1, %s21
      %s31 = scalar_select %p28, %s30, %s21
      %p32 = scmp.ge.s32.totalorder %s31, 2
      %s33 = scalar_select %p32, 0, %s31
      %s34 = ssub.s32 %s21, %s33
      %s35 = ssub.s32 %s22, %s29
      %s36 = sor.u32 %s34, %s35
      %p37 = scmp.eq.s32.totalorder %s36, 0
      %s39 = sadd.s32 %s38, 1
      %s40 = scalar_select %p37, %s38, %s39
      %p43 = pneg %p37
      %p44 = scmp.eq.s32.totalorder %s14, 1
      %p45 = por %p43, %p44
      %p46 = scmp.ne.s32.totalorder %s38, %s41
      %p47 = scmp.eq.s32.totalorder %s14, 0
      %p48 = por %p46, %p47
      %p49 = scmp.ne.s32.totalorder %s38, %s41
      %p50 = scmp.eq.s32.totalorder %s19, 1
      %p51 = por %p49, %p50
      %p52 = scmp.ne.s32.totalorder %s41, %s42
      %p53 = scmp.eq.s32.totalorder %s19, 0
      %p54 = por %p52, %p53
      %p55 = scmp.ne.s32.totalorder %s41, %s42
      %p56 = scmp.eq.s32.totalorder %s20, 1
      %p57 = por %p55, %p56
      %p59 = scmp.ne.s32.totalorder %s42, %s58
      %p60 = scmp.eq.s32.totalorder %s20, 0
      %p61 = por %p59, %p60
      %s63 = sadd.s32 %s62, 1
      %p66 = scmp.eq.s32.totalorder %s14, 1
      %p67 = scmp.ne.s32.totalorder %s62, %s64
      %p68 = scmp.eq.s32.totalorder %s14, 0
      %p69 = por %p67, %p68
      %p70 = scmp.ne.s32.totalorder %s62, %s64
      %p71 = scmp.eq.s32.totalorder %s19, 1
      %p72 = por %p70, %p71
      %p73 = scmp.ne.s32.totalorder %s64, %s65
      %p74 = scmp.eq.s32.totalorder %s19, 0
      %p75 = por %p73, %p74
      %p76 = scmp.ne.s32.totalorder %s64, %s65
      %p77 = scmp.eq.s32.totalorder %s20, 1
      %p78 = por %p76, %p77
      %p80 = scmp.ne.s32.totalorder %s65, %s79
      %p81 = scmp.eq.s32.totalorder %s20, 0
      %p82 = por %p80, %p81
      %s84 = sadd.s32 %s83, 1
      %p87 = scmp.eq.s32.totalorder %s14, 1
      %p88 = scmp.ne.s32.totalorder %s83, %s85
      %p89 = scmp.eq.s32.totalorder %s14, 0
      %p90 = por %p88, %p89
      %p91 = scmp.ne.s32.totalorder %s83, %s85
      %p92 = scmp.eq.s32.totalorder %s19, 1
      %p93 = por %p91, %p92
      %p94 = scmp.ne.s32.totalorder %s85, %s86
      %p95 = scmp.eq.s32.totalorder %s19, 0
      %p96 = por %p94, %p95
      %p97 = scmp.ne.s32.totalorder %s85, %s86
      %p98 = scmp.eq.s32.totalorder %s20, 1
      %p99 = por %p97, %p98
      %p101 = scmp.ne.s32.totalorder %s86, %s100
      %p102 = scmp.eq.s32.totalorder %s20, 0
      %p103 = por %p101, %p102
      %s105 = sadd.s32 %s104, 1
      %p108 = scmp.eq.s32.totalorder %s14, 1
      %p109 = scmp.ne.s32.totalorder %s104, %s106
      %p110 = scmp.eq.s32.totalorder %s14, 0
      %p111 = por %p109, %p110
      %p112 = scmp.ne.s32.totalorder %s104, %s106
      %p113 = scmp.eq.s32.totalorder %s19, 1
      %p114 = por %p112, %p113
      %p115 = scmp.ne.s32.totalorder %s106, %s107
      %p116 = scmp.eq.s32.totalorder %s19, 0
      %p117 = por %p115, %p116
      %p118 = scmp.ne.s32.totalorder %s106, %s107
      %p119 = scmp.eq.s32.totalorder %s20, 1
      %p120 = por %p118, %p119
      %p122 = scmp.ne.s32.totalorder %s107, %s121
      %p123 = scmp.eq.s32.totalorder %s20, 0
      %p124 = por %p122, %p123
      %s126 = sadd.s32 %s125, 1
      %p129 = scmp.eq.s32.totalorder %s14, 1
      %p130 = scmp.ne.s32.totalorder %s125, %s127
      %p131 = scmp.eq.s32.totalorder %s14, 0
      %p132 = por %p130, %p131
      %p133 = scmp.ne.s32.totalorder %s125, %s127
      %p134 = scmp.eq.s32.totalorder %s19, 1
      %p135 = por %p133, %p134
      %p136 = scmp.ne.s32.totalorder %s127, %s128
      %p137 = scmp.eq.s32.totalorder %s19, 0
      %p138 = por %p136, %p137
      %p139 = scmp.ne.s32.totalorder %s127, %s128
      %p140 = scmp.eq.s32.totalorder %s20, 1
      %p141 = por %p139, %p140
      %p143 = scmp.ne.s32.totalorder %s128, %s142
      %p144 = scmp.eq.s32.totalorder %s20, 0
      %p145 = por %p143, %p144
      %s146 = ssub.s32 %s21, %s33
      %s147 = ssub.s32 %s22, %s29
      %s148 = sor.u32 %s146, %s147
      %p149 = scmp.eq.s32.totalorder %s148, 0
      %s151 = sadd.s32 %s150, 1
      %s152 = scalar_select %p149, %s150, %s151
      %p155 = pneg %p149
      %p156 = scmp.eq.s32.totalorder %s14, 1
      %p157 = por %p155, %p156
      %p158 = scmp.ne.s32.totalorder %s150, %s153
      %p159 = scmp.eq.s32.totalorder %s14, 0
      %p160 = por %p158, %p159
      %p161 = scmp.ne.s32.totalorder %s150, %s153
      %p162 = scmp.eq.s32.totalorder %s19, 1
      %p163 = por %p161, %p162
      %p164 = scmp.ne.s32.totalorder %s153, %s154
      %p165 = scmp.eq.s32.totalorder %s19, 0
      %p166 = por %p164, %p165
      %p167 = scmp.ne.s32.totalorder %s153, %s154
      %p168 = scmp.eq.s32.totalorder %s20, 1
      %p169 = por %p167, %p168
      %p171 = scmp.ne.s32.totalorder %s154, %s170
      %p172 = scmp.eq.s32.totalorder %s20, 0
      %p173 = por %p171, %p172
      %p174 = scmp.le.s32.totalorder 1, %s14
      %p175 = scmp.lt.s32.totalorder %s14, 3
      %p176 = pnand %p174, %p175
      %p177 = pneg %p176
      // Predicated region
      $region9: #{tpu_custom_call.1} parent=5 // pred_check
        _
      $region10: #{tpu_custom_call.1} parent=5 // pred_check_branch
        %179 = sbr.rel (%p176) target = $region12
      $region11: #{tpu_custom_call.1} parent=5 // pred_region
        %s180 = ssub.s32 %s14, 1
        // Predicated region
        $region13: #{tpu_custom_call.1} parent=11 // pred_check
          %p181 = pneg %p75
        $region14: #{tpu_custom_call.1} parent=11 // pred_check_branch
          %183 = sbr.rel (%p181) target = $region16
        $region15: #{tpu_custom_call.1} parent=11 // pred_region
          _
        $region16: #{tpu_custom_call.1} parent=11 // pred_fallthru
          _
        // Predicated region
        $region17: #{tpu_custom_call.1} parent=11 // pred_check
          %p184 = pneg %p96
        $region18: #{tpu_custom_call.1} parent=11 // pred_check_branch
          %186 = sbr.rel (%p184) target = $region20
        $region19: #{tpu_custom_call.1} parent=11 // pred_region
          _
        $region20: #{tpu_custom_call.1} parent=11 // pred_fallthru
          _
        // Predicated region
        $region21: #{tpu_custom_call.1} parent=11 // pred_check
          %p187 = pneg %p117
        $region22: #{tpu_custom_call.1} parent=11 // pred_check_branch
          %189 = sbr.rel (%p187) target = $region24
        $region23: #{tpu_custom_call.1} parent=11 // pred_region
          _
        $region24: #{tpu_custom_call.1} parent=11 // pred_fallthru
          _
        // Predicated region
        $region25: #{tpu_custom_call.1} parent=11 // pred_check
          %p190 = pneg %p138
        $region26: #{tpu_custom_call.1} parent=11 // pred_check_branch
          %192 = sbr.rel (%p190) target = $region28
        $region27: #{tpu_custom_call.1} parent=11 // pred_region
          _
        $region28: #{tpu_custom_call.1} parent=11 // pred_fallthru
          _
      $region12: #{tpu_custom_call.1} parent=5 // pred_fallthru
        _
      %p193 = scmp.lt.s32.totalorder %s14, 2
      // Predicated region
      $region29: #{tpu_custom_call.1} parent=5 // pred_check
        %p194 = pneg %p193
      $region30: #{tpu_custom_call.1} parent=5 // pred_check_branch
        %196 = sbr.rel (%p194) target = $region32
      $region31: #{tpu_custom_call.1} parent=5 // pred_region
        // Predicated region
        $region33: #{tpu_custom_call.1} parent=31 // pred_check
          %p197 = pneg %p48
        $region34: #{tpu_custom_call.1} parent=31 // pred_check_branch
          %199 = sbr.rel (%p197) target = $region36
        $region35: #{tpu_custom_call.1} parent=31 // pred_region
          %s200 = smul.u32 2, %s22
          %p201 = scmp.lt.s32.totalorder %s21, 1
          %s202 = scalar_select %p201, %s21, 1
          %p203 = scmp.lt.s32.totalorder %s200, 1
          %s204 = scalar_select %p203, %s200, 1
          %s205 = smul.addr %s202, 2
          %s206 = sadd.s32 %s204, %s205
          %s207 = smul.addr %s206, 4
          %s208 = scalar_lea.vmem %s0, %s207
          %s209 = smul.u32 2, %s22
        $region36: #{tpu_custom_call.1} parent=31 // pred_fallthru
          _
      $region32: #{tpu_custom_call.1} parent=5 // pred_fallthru
        _
      %p210 = scmp.le.s32.totalorder 1, %s14
      %p211 = scmp.lt.s32.totalorder %s14, 3
      %p212 = pnand %p210, %p211
      %p213 = pneg %p212
      // Predicated region
      $region37: #{tpu_custom_call.1} parent=5 // pred_check
        _
      $region38: #{tpu_custom_call.1} parent=5 // pred_check_branch
        %215 = sbr.rel (%p212) target = $region40
      $region39: #{tpu_custom_call.1} parent=5 // pred_region
        %s216 = ssub.s32 %s14, 1
        %s217 = smul.u32 2, %s24
        %p218 = scmp.lt.s32.totalorder %s23, 1
        %s219 = scalar_select %p218, %s23, 1
        %p220 = scmp.lt.s32.totalorder %s217, 1
        %s221 = scalar_select %p220, %s217, 1
        %s222 = smul.addr %s219, 2
        %s223 = sadd.s32 %s221, %s222
        %s224 = smul.addr %s223, 4
        %s225 = scalar_lea.vmem %s0, %s224
        %p226 = pneg %p54
        %p227 = pneg %p51
        %p228 = pneg %p75
        %p229 = pneg %p72
        %p230 = pneg %p96
        %p231 = pneg %p93
        %p232 = pneg %p117
        %p233 = pneg %p114
        %p234 = pneg %p138
        %p235 = pneg %p135
        %p236 = pneg %p166
        %p237 = pneg %p163
        %s238 = sand.u32 %s153, 1
        %s239 = scalar_lea.sflag [#allocation3], %s238
        %s240 = sand.u32 %s153, 1
        %s241 = smul.addr %s240, 8
        %s242 = scalar_lea.vmem [#allocation2], %s241
        %s243 = smul.u32 2, %s24
        %p244 = scmp.lt.s32.totalorder %s23, 1
        %s245 = scalar_select %p244, %s23, 1
        %p246 = scmp.lt.s32.totalorder %s243, 1
        %s247 = scalar_select %p246, %s243, 1
        %s248 = smul.addr %s245, 2
        %s249 = sadd.s32 %s247, %s248
        %s250 = smul.addr %s249, 4
        %s251 = scalar_lea.vmem %s0, %s250
        %s252 = smul.u32 2, %s24
        %s253 = smul.u32 2, %s24
        %v254 = vld [vmem:[%s251] sm:$0xff]
        %v255 = vld [vmem:[%s1] sm:$0xff]
        %v256 = vld [vmem:[%s1 + $0x8] sm:$0xff]
        %v257 = vld [vmem:[%s1 + $0x10] sm:$0xff]
        %v258 = vld [vmem:[%s1 + $0x18] sm:$0xff]
        %v259 = vld [vmem:[%s2] sm:$0xff]
        %v260 = vld [vmem:[%s2 + $0x8] sm:$0xff]
        %v261 = vld [vmem:[%s2 + $0x10] sm:$0xff]
        %v262 = vld [vmem:[%s2 + $0x18] sm:$0xff]
        %264 = vset.pattern.permute.xlu0 0
        %265 = vperm.xlu0 %264, %v259
        %v266 = vpop.permute.xlu0 %265
        %269 = vset.pattern.permute.xlu0 0
        %270 = vperm.xlu0 %269, %v260
        %v271 = vpop.permute.xlu0 %270
        %274 = vset.pattern.permute.xlu0 0
        %275 = vperm.xlu0 %274, %v261
        %v276 = vpop.permute.xlu0 %275
        %279 = vset.pattern.permute.xlu0 0
        %280 = vperm.xlu0 %279, %v262
        %v281 = vpop.permute.xlu0 %280
        %v284 = vcombine.high %v254, %v254
        %vm285 = vcmask 31744
        %v287 = vsel %vm285, %v255, 0
        %v290 = vsel %vm285, %v256, 0
        %v293 = vsel %vm285, %v257, 0
        %v296 = vsel %vm285, %v258, 0
        %vm298 = vcmask 1043456
        %v299 = vsel %vm298, %v254, 0
        %v301 = vsel %vm298, %v284, 0
        %303 = vmatprep.subr.mxu0 0.0
        %304 = vmatpush1.msra.mxu0 0.0
        %305 = vmatprep.subr.mxu0 0.0
        %306 = vmatpush1.msra.mxu0 0.0
        %307 = vmatprep.subr.mxu0 0.0
        %308 = vmatpush1.msra.mxu0 0.0
        %309 = vmatprep.subr.mxu0 0.0
        %310 = vmatpush1.msra.mxu0 0.0
        %311 = vmatprep.subr.mxu0 0.0
        %312 = vmatpush1.msra.mxu0 0.0
        %313 = vmatprep.subr.mxu0 0.0
        %314 = vmatpush1.msra.mxu0 0.0
        %315 = vmatprep.subr.mxu0 0.0
        %316 = vmatpush1.msra.mxu0 0.0
        %317 = vmatprep.subr.mxu0 0.0
        %318 = vmatpush1.msra.mxu0 0.0
        %319 = vmatprep.subr.mxu0 0.0
        %320 = vmatpush1.msra.mxu0 0.0
        %321 = vmatprep.subr.mxu0 0.0
        %322 = vmatpush1.msra.mxu0 0.0
        %323 = vmatprep.subr.mxu0 0.0
        %324 = vmatpush1.msra.mxu0 0.0
        %325 = vmatprep.subr.mxu0 0.0
        %326 = vmatpush1.msra.mxu0 0.0
        %327 = vmatprep.subr.mxu0 0.0
        %328 = vmatpush1.msra.mxu0 0.0
        %329 = vmatprep.subr.mxu0 0.0
        %330 = vmatpush1.msra.mxu0 0.0
        %331 = vmatprep.subr.mxu0 0.0
        %332 = vmatpush1.msra.mxu0 0.0
        %333 = vmatprep.subr.mxu0 %v301
        %334 = vmatpush1.msra.mxu0 %v299
        %335 = vmatprep.subr.mxu0 0.0
        %336 = vmatpush2.msra.mxu0 0.0
        %337 = vmatprep.subr.mxu0 0.0
        %338 = vmatpush2.msra.mxu0 0.0
        %339 = vmatprep.subr.mxu0 0.0
        %340 = vmatpush2.msra.mxu0 0.0
        %341 = vmatprep.subr.mxu0 0.0
        %342 = vmatpush2.msra.mxu0 0.0
        %343 = vmatprep.subr.mxu0 0.0
        %344 = vmatpush2.msra.mxu0 0.0
        %345 = vmatprep.subr.mxu0 0.0
        %346 = vmatpush2.msra.mxu0 0.0
        %347 = vmatprep.subr.mxu0 0.0
        %348 = vmatpush2.msra.mxu0 0.0
        %349 = vmatprep.subr.mxu0 0.0
        %350 = vmatpush2.msra.mxu0 0.0
        %351 = vmatprep.subr.mxu0 0.0
        %352 = vmatpush2.msra.mxu0 0.0
        %353 = vmatprep.subr.mxu0 0.0
        %354 = vmatpush2.msra.mxu0 0.0
        %355 = vmatprep.subr.mxu0 0.0
        %356 = vmatpush2.msra.mxu0 0.0
        %357 = vmatprep.subr.mxu0 0.0
        %358 = vmatpush2.msra.mxu0 0.0
        %359 = vmatprep.subr.mxu0 0.0
        %360 = vmatpush2.msra.mxu0 0.0
        %361 = vmatprep.subr.mxu0 0.0
        %362 = vmatpush2.msra.mxu0 0.0
        %363 = vmatprep.subr.mxu0 0.0
        %364 = vmatpush2.msra.mxu0 0.0
        %365 = vmatprep.subr.mxu0 0.0
        %366 = vmatpush2.msra.mxu0 0.0
        %367 = vmatprep.mubr.f32.mxu0 0.0
        %368 = vmatmul.mubr.f32.gmra.mxu0 %v287
        %v369 = vpop.f32.mrf.mxu0
        %v370 = vadd.f32 %v266, %v369
        %v371 = vpop.f32.mrf.mxu0
        %v372 = vadd.f32 %v266, %v371
        %373 = vmatprep.mubr.f32.mxu0 0.0
        %374 = vmatmul.mubr.f32.gmra.mxu0 %v290
        %v375 = vpop.f32.mrf.mxu0
        %v376 = vadd.f32 %v271, %v375
        %v377 = vpop.f32.mrf.mxu0
        %v378 = vadd.f32 %v271, %v377
        %379 = vmatprep.mubr.f32.mxu0 0.0
        %380 = vmatmul.mubr.f32.gmra.mxu0 %v293
        %v381 = vpop.f32.mrf.mxu0
        %v382 = vadd.f32 %v276, %v381
        %v383 = vpop.f32.mrf.mxu0
        %v384 = vadd.f32 %v276, %v383
        %385 = vmatprep.mubr.f32.mxu0 0.0
        %386 = vmatmul.mubr.f32.gmra.mxu0 %v296
        %v387 = vpop.f32.mrf.mxu0
        %v388 = vadd.f32 %v281, %v387
        %v389 = vpop.f32.mrf.mxu0
        %v390 = vadd.f32 %v281, %v389
        %391 = vdwg.mxu0
        %v392 = vmul.f32 %v370, 0.5
        %v393 = vmul.f32 %v372, 0.5
        %v394 = vmul.f32 %v376, 0.5
        %v395 = vmul.f32 %v378, 0.5
        %v396 = vmul.f32 %v382, 0.5
        %v397 = vmul.f32 %v384, 0.5
        %v398 = vmul.f32 %v388, 0.5
        %v399 = vmul.f32 %v390, 0.5
        %v400 = vmul.f32 %v370, 0.70710677
        %v401 = vmul.f32 %v372, 0.70710677
        %v402 = vmul.f32 %v376, 0.70710677
        %v403 = vmul.f32 %v378, 0.70710677
        %v404 = vmul.f32 %v382, 0.70710677
        %v405 = vmul.f32 %v384, 0.70710677
        %v406 = vmul.f32 %v388, 0.70710677
        %v407 = vmul.f32 %v390, 0.70710677
        %v408 = verf.f32.pop %v400
        %v409 = verf.f32.pop %v401
        %v410 = verf.f32.pop %v402
        %v411 = verf.f32.pop %v403
        %v412 = verf.f32.pop %v404
        %v413 = verf.f32.pop %v405
        %v414 = verf.f32.pop %v406
        %v415 = verf.f32.pop %v407
        %v416 = vadd.f32 %v408, 1.0
        %v417 = vadd.f32 %v409, 1.0
        %v418 = vadd.f32 %v410, 1.0
        %v419 = vadd.f32 %v411, 1.0
        %v420 = vadd.f32 %v412, 1.0
        %v421 = vadd.f32 %v413, 1.0
        %v422 = vadd.f32 %v414, 1.0
        %v423 = vadd.f32 %v415, 1.0
        %v424 = vmul.f32 %v392, %v416
        %v425 = vmul.f32 %v393, %v417
        %v426 = vmul.f32 %v394, %v418
        %v427 = vmul.f32 %v395, %v419
        %v428 = vmul.f32 %v396, %v420
        %v429 = vmul.f32 %v397, %v421
        %v430 = vmul.f32 %v398, %v422
        %v431 = vmul.f32 %v399, %v423
        %v432 = vld [vmem:[%s3] sm:$0xf]
        %v433 = vld [vmem:[%s4] sm:$0xf]
        %435 = vset.pattern.permute.xlu0 0
        %436 = vperm.xlu0 %435, %v433
        %v437 = vpop.permute.xlu0 %436
        %vm439 = vcmask 261120
        %v441 = vsel %vm439, %v432, 0
        %443 = vmatprep.subr.mxu0 0.0
        %444 = vmatpush1.msra.mxu0 0.0
        %445 = vmatprep.subr.mxu0 0.0
        %446 = vmatpush1.msra.mxu0 0.0
        %447 = vmatprep.subr.mxu0 0.0
        %448 = vmatpush1.msra.mxu0 0.0
        %449 = vmatprep.subr.mxu0 0.0
        %450 = vmatpush1.msra.mxu0 0.0
        %451 = vmatprep.subr.mxu0 0.0
        %452 = vmatpush1.msra.mxu0 0.0
        %453 = vmatprep.subr.mxu0 0.0
        %454 = vmatpush1.msra.mxu0 0.0
        %455 = vmatprep.subr.mxu0 0.0
        %456 = vmatpush1.msra.mxu0 0.0
        %457 = vmatprep.subr.mxu0 0.0
        %458 = vmatpush1.msra.mxu0 0.0
        %459 = vmatprep.subr.mxu0 0.0
        %460 = vmatpush1.msra.mxu0 0.0
        %461 = vmatprep.subr.mxu0 0.0
        %462 = vmatpush1.msra.mxu0 0.0
        %463 = vmatprep.subr.mxu0 0.0
        %464 = vmatpush1.msra.mxu0 0.0
        %465 = vmatprep.subr.mxu0 0.0
        %466 = vmatpush1.msra.mxu0 0.0
        %467 = vmatprep.subr.mxu0 %v431
        %468 = vmatpush1.msra.mxu0 %v430
        %469 = vmatprep.subr.mxu0 %v429
        %470 = vmatpush1.msra.mxu0 %v428
        %471 = vmatprep.subr.mxu0 %v427
        %472 = vmatpush1.msra.mxu0 %v426
        %473 = vmatprep.subr.mxu0 %v425
        %474 = vmatpush1.msra.mxu0 %v424
        %475 = vmatprep.subr.mxu0 0.0
        %476 = vmatpush2.msra.mxu0 0.0
        %477 = vmatprep.subr.mxu0 0.0
        %478 = vmatpush2.msra.mxu0 0.0
        %479 = vmatprep.subr.mxu0 0.0
        %480 = vmatpush2.msra.mxu0 0.0
        %481 = vmatprep.subr.mxu0 0.0
        %482 = vmatpush2.msra.mxu0 0.0
        %483 = vmatprep.subr.mxu0 0.0
        %484 = vmatpush2.msra.mxu0 0.0
        %485 = vmatprep.subr.mxu0 0.0
        %486 = vmatpush2.msra.mxu0 0.0
        %487 = vmatprep.subr.mxu0 0.0
        %488 = vmatpush2.msra.mxu0 0.0
        %489 = vmatprep.subr.mxu0 0.0
        %490 = vmatpush2.msra.mxu0 0.0
        %491 = vmatprep.subr.mxu0 0.0
        %492 = vmatpush2.msra.mxu0 0.0
        %493 = vmatprep.subr.mxu0 0.0
        %494 = vmatpush2.msra.mxu0 0.0
        %495 = vmatprep.subr.mxu0 0.0
        %496 = vmatpush2.msra.mxu0 0.0
        %497 = vmatprep.subr.mxu0 0.0
        %498 = vmatpush2.msra.mxu0 0.0
        %499 = vmatprep.subr.mxu0 0.0
        %500 = vmatpush2.msra.mxu0 0.0
        %501 = vmatprep.subr.mxu0 0.0
        %502 = vmatpush2.msra.mxu0 0.0
        %503 = vmatprep.subr.mxu0 0.0
        %504 = vmatpush2.msra.mxu0 0.0
        %505 = vmatprep.subr.mxu0 0.0
        %506 = vmatpush2.msra.mxu0 0.0
        %507 = vmatprep.mubr.f32.mxu0 0.0
        %508 = vmatmul.mubr.f32.gmra.mxu0 %v441
        %v509 = vpop.f32.mrf.mxu0
        %v510 = vadd.f32 %v437, %v509
        %v511 = vpop.f32.mrf.mxu0
        %v512 = vadd.f32 %v437, %v511
        %513 = vdwg.mxu0
        %v516 = vcombine.low %v510, %v512
        %518 = vst [vmem:[%s242] sm:$0xff] %v516
        %s519 = sand.u32 %s153, 1
        %s520 = scalar_lea.sflag [#allocation3], %s519
        %s521 = sand.u32 %s153, 1
        %s522 = smul.addr %s521, 8
        %s523 = scalar_lea.vmem [#allocation2], %s522
        // Predicated region
        $region41: #{tpu_custom_call.1} parent=39 // pred_check
          %p524 = pneg %p163
        $region42: #{tpu_custom_call.1} parent=39 // pred_check_branch
          %526 = sbr.rel (%p524) target = $region44
        $region43: #{tpu_custom_call.1} parent=39 // pred_region
          %s527 = smul.u32 2, %s24
          %s529 = ssub.s32 128, 128
          %530 = vsyncadd %s520, %s529
          %s531 = smul.addr %s23, 2
          %s532 = sadd.s32 %s527, %s531
          %s533 = smul.addr %s532, 64
          %s534 = scalar_lea.hbm %s5, %s533
          %s536 = sshll.u32 %s523, 4
          %s537 = int_to_ptr.vmem [resolvable:$true] %s536
          %539 = dma.vmem_to_hbm [thread:$0]  %s537, 128, %s534, %s520
        $region44: #{tpu_custom_call.1} parent=39 // pred_fallthru
          _
      $region40: #{tpu_custom_call.1} parent=5 // pred_fallthru
        _
      %p540 = scmp.le.s32.totalorder 2, %s14
      // Predicated region
      $region45: #{tpu_custom_call.1} parent=5 // pred_check
        %p541 = pneg %p540
      $region46: #{tpu_custom_call.1} parent=5 // pred_check_branch
        %543 = sbr.rel (%p541) target = $region48
      $region47: #{tpu_custom_call.1} parent=5 // pred_region
        %s544 = ssub.s32 %s14, 2
        // Predicated region
        $region49: #{tpu_custom_call.1} parent=47 // pred_check
          %p545 = pneg %p169
        $region50: #{tpu_custom_call.1} parent=47 // pred_check_branch
          %547 = sbr.rel (%p545) target = $region52
        $region51: #{tpu_custom_call.1} parent=47 // pred_region
          %s548 = sand.u32 %s154, 1
          %s549 = scalar_lea.sflag [#allocation3], %s548
          %s550 = sand.u32 %s154, 1
          %s551 = smul.addr %s550, 8
          %s552 = scalar_lea.vmem [#allocation2], %s551
          %553 = dma.done %s549, 128
        $region52: #{tpu_custom_call.1} parent=47 // pred_fallthru
          _
      $region48: #{tpu_custom_call.1} parent=5 // pred_fallthru
        _
    $region6: #{tpu_custom_call.1} parent=1 // loop_footer
      %s18 = sadd.s32 1, %s14
    $region7: #{tpu_custom_call.1} parent=1 // loop_footer_branch
      %13 = sbr.rel target = $region3
    $region8: #{tpu_custom_call.1} parent=1 // loop_exit
      _
    %554 = vsyncpa [#allocation3], 1
    %s555 = scalar_lea.sflag [#allocation3], 1
    %556 = vsyncpa %s555, 1

</llo_original>
